<compile_context>
chip_gen: v6e
topology: v6e:2x2x1
jax: 0.10.0
libtpu: 0.0.40
codegen_flags: <defaults>
</compile_context>

<pallas_src>
import functools

import jax
import jax.numpy as jnp
from jax import lax
from jax.experimental import pallas as pl
from jax.experimental.pallas import tpu as pltpu

_LANE = 128


def _dice_kernel(out_ref, tgt_ref, score_ref, inter_acc, pred_acc, tgt_acc, *,
                 num_classes, true_s, needs_mask):
    s = pl.program_id(1)
    num_s = pl.num_programs(1)

    # Zero the per-sample accumulators at the start of each sample.
    @pl.when(s == 0)
    def _():
        inter_acc[...] = jnp.zeros_like(inter_acc)
        pred_acc[...] = jnp.zeros_like(pred_acc)
        tgt_acc[...] = jnp.zeros_like(tgt_acc)

    x = out_ref[0]                                   # (Cin, TS) probabilities
    t = tgt_ref[0].astype(jnp.int32)                 # (1, TS) labels
    cin, ts = x.shape
    C = num_classes

    c_ids = lax.broadcasted_iota(jnp.int32, (C, ts), 0)          # (C, TS)

    if cin == 1 and C == 2:
        # Binary fast path: argmax([1-p, p]) with first-max tie-breaking is
        # class 1 iff p > 0.5 (p == 0.5 -> class 0, matching torch.argmax).
        pred_idx = (x > jnp.asarray(0.5, x.dtype)).astype(jnp.int32)   # (1, TS)
    else:
        # argmax over the class (sublane) axis, first-max tie-breaking like
        # torch: smallest class index achieving the per-pixel maximum.
        mx = jnp.max(x, axis=0, keepdims=True)                          # (1, TS)
        cand = jnp.where(x == mx, c_ids, jnp.int32(C))                  # (C, TS)
        pred_idx = jnp.min(cand, axis=0, keepdims=True)                 # (1, TS)

    pred_oh = (c_ids == pred_idx).astype(jnp.float32)                   # (C, TS)
    tgt_oh = (c_ids == t).astype(jnp.float32)                           # (C, TS)

    if needs_mask:
        # Spatial dim was padded up to a multiple of the tile: mask the tail.
        lane = lax.broadcasted_iota(jnp.int32, (1, ts), 1)
        valid = ((s * ts + lane) < true_s).astype(jnp.float32)          # (1, TS)
        pred_oh = pred_oh * valid
        tgt_oh = tgt_oh * valid

    # Lane-axis reductions land naturally on sublanes -> (C, 1) accumulators.
    inter_acc[...] += jnp.sum(pred_oh * tgt_oh, axis=1, keepdims=True)
    pred_acc[...] += jnp.sum(pred_oh, axis=1, keepdims=True)
    tgt_acc[...] += jnp.sum(tgt_oh, axis=1, keepdims=True)

    # End of this sample's spatial tiles: emit its per-class dice score.
    @pl.when(s == num_s - 1)
    def _():
        card = jnp.maximum(pred_acc[...] + tgt_acc[...], 1.0)   # clamp(min=1)
        score_ref[0] = 2.0 * inter_acc[...] / card


def _choose_tile(s_total, bytes_per_col):
    """Pick a 128-aligned spatial tile sized for the smallest default VMEM."""
    budget = 8 * 1024 * 1024      # conservative: fits v5e/v6e/v7x scoped defaults
    cap = 8192                    # diminishing returns beyond this
    max_ts = max(_LANE, (budget // (2 * bytes_per_col)) // _LANE * _LANE)
    ts = min(cap, max_ts)
    s_lane = -(-s_total // _LANE) * _LANE
    if s_lane <= ts:
        return s_lane, s_lane     # single spatial tile per sample
    num_s = -(-s_total // ts)
    return ts, num_s * ts


def dice(output, target):
    """Per-class Dice score, matching the PyTorch `Dice` module.

    Args:
      output: (N, C, *) or (N, 1, *) float probabilities.
      target: (N, 1, *) integer labels in [0, C-1].

    Returns:
      (C,) float32 dice scores (C == 2 for single-channel input).
    """
    orig_c = output.shape[1]
    binary = orig_c == 1
    num_classes = 2 if binary else orig_c
    cin = 1 if binary else orig_c          # channels actually streamed from HBM

    N = output.shape[0]
    S = 1
    for d in output.shape[2:]:
        S *= d

    probs = output.reshape(N, cin, S)      # keep native dtype (bf16 stays bf16)
    lbl_dtype = jnp.int8 if num_classes <= 127 else jnp.int32
    labels = target.reshape(N, 1, S).astype(lbl_dtype)

    prob_bytes = jnp.dtype(probs.dtype).itemsize
    lbl_bytes = jnp.dtype(lbl_dtype).itemsize
    ts, s_pad = _choose_tile(S, cin * prob_bytes + lbl_bytes)
    num_s = s_pad // ts
    if s_pad != S:
        probs = jnp.pad(probs, ((0, 0), (0, 0), (0, s_pad - S)))
        labels = jnp.pad(labels, ((0, 0), (0, 0), (0, s_pad - S)))

    kernel = functools.partial(
        _dice_kernel,
        num_classes=num_classes,
        true_s=S,
        needs_mask=(s_pad != S),
    )

    grid_spec = pltpu.PrefetchScalarGridSpec(
        num_scalar_prefetch=0,
        grid=(N, num_s),
        in_specs=[
            pl.BlockSpec((1, cin, ts), lambda n, s: (n, 0, s)),
            pl.BlockSpec((1, 1, ts), lambda n, s: (n, 0, s)),
        ],
        out_specs=pl.BlockSpec((1, num_classes, 1), lambda n, s: (n, 0, 0)),
        scratch_shapes=[
            pltpu.VMEM((num_classes, 1), jnp.float32),   # intersection
            pltpu.VMEM((num_classes, 1), jnp.float32),   # pred cardinality
            pltpu.VMEM((num_classes, 1), jnp.float32),   # target cardinality
        ],
    )

    cost = pl.CostEstimate(
        flops=6 * N * num_classes * S,
        transcendentals=0,
        bytes_accessed=(N * cin * s_pad * prob_bytes
                        + N * s_pad * lbl_bytes
                        + N * num_classes * 4),
    )

    per_sample = pl.pallas_call(
        kernel,
        out_shape=jax.ShapeDtypeStruct((N, num_classes, 1), jnp.float32),
        grid_spec=grid_spec,
        compiler_params=pltpu.CompilerParams(
            dimension_semantics=("parallel", "arbitrary"),
            vmem_limit_bytes=32 * 1024 * 1024),
        cost_estimate=cost,
    )(probs, labels)

    # Mean over the batch (kept out of the kernel so N stays core-parallel).
    return jnp.mean(per_sample[:, :, 0], axis=0)


def _dice_reference(output, target):
    """Pure-JAX reference mirroring the PyTorch forward."""
    if output.shape[1] == 1:
        output = jnp.concatenate([1.0 - output, output], axis=1)
    N, C = output.shape[0], output.shape[1]
    pred_idx = jnp.argmax(output, axis=1)                       # (N, *)
    pred = jax.nn.one_hot(pred_idx, C, axis=1, dtype=jnp.float32)
    tgt = jax.nn.one_hot(target[:, 0], C, axis=1, dtype=jnp.float32)
    reduced = tuple(range(2, output.ndim))
    inter = jnp.sum(pred * tgt, axis=reduced)
    card = jnp.sum(pred, axis=reduced) + jnp.sum(tgt, axis=reduced)
    return jnp.mean(2.0 * inter / jnp.maximum(card, 1.0), axis=0)


if __name__ == "__main__":
    key = jax.random.PRNGKey(0)
    k1, k2, k3, k4 = jax.random.split(key, 4)

    # --- Multi-class case: N=2, C=4, 16x16 spatial (128-multiple path) ---
    N, C, H, W = 2, 4, 16, 16
    logits = jax.random.normal(k1, (N, C, H, W), dtype=jnp.float32)
    probs = jax.nn.softmax(logits, axis=1)                       # (N, C, H, W)
    target = jax.random.randint(k2, (N, 1, H, W), 0, C, dtype=jnp.int32)

    score = jax.block_until_ready(dice(probs, target))
    ref = _dice_reference(probs, target)
    assert score.shape == (C,)
    assert jnp.allclose(score, ref, atol=1e-6), (score, ref)

    # --- Binary fast path + pad/mask path: N=2, C=1, 15x15 spatial ---
    Nb, Hb, Wb = 2, 15, 15
    p_bin = jax.nn.sigmoid(jax.random.normal(k3, (Nb, 1, Hb, Wb),
                                             dtype=jnp.float32))
    t_bin = jax.random.randint(k4, (Nb, 1, Hb, Wb), 0, 2, dtype=jnp.int32)

    score_b = jax.block_until_ready(dice(p_bin, t_bin))
    ref_b = _dice_reference(p_bin, t_bin)
    assert score_b.shape == (2,)
    assert jnp.allclose(score_b, ref_b, atol=1e-6), (score_b, ref_b)

    print("KERNEL_OK")
</pallas_src>

<mosaic_0001>
module attributes {stable_mosaic.version = 11 : i64} {
  func.func @_dice_kernel(%arg0: i32, %arg1: i32, %arg2: memref<1x4x256xf32, #tpu.memory_space<vmem>>, %arg3: memref<1x1x256xi8, #tpu.memory_space<vmem>>, %arg4: memref<1x4x1xf32, #tpu.memory_space<vmem>>, %arg5: memref<4x1xf32, #tpu.memory_space<vmem>>, %arg6: memref<4x1xf32, #tpu.memory_space<vmem>>, %arg7: memref<4x1xf32, #tpu.memory_space<vmem>>) attributes {dimension_semantics = [#tpu.dimension_semantics<parallel>, #tpu.dimension_semantics<arbitrary>], iteration_bounds = array<i64: 2, 1>, scalar_prefetch = 0 : i64, scratch_operands = 3 : i64, tpu.core_type = #tpu.core_type<tc>, window_params = [{transform_indices = @transform_0, window_bounds = array<i64: 1, 4, 256>}, {transform_indices = @transform_1, window_bounds = array<i64: 1, 1, 256>}, {transform_indices = @transform_2, window_bounds = array<i64: 1, 4, 1>}]} {
    %c0_i32 = arith.constant 0 : i32
    %0 = arith.cmpi eq, %arg1, %c0_i32 : i32
    %1 = arith.extui %0 : i1 to i32
    %c0_i32_0 = arith.constant 0 : i32
    %2 = arith.cmpi ne, %1, %c0_i32_0 : i32
    scf.if %2 {
      %cst_24 = arith.constant 0.000000e+00 : f32
      %44 = vector.broadcast %cst_24 : f32 to vector<4x1xf32>
      %c0_25 = arith.constant 0 : index
      %c0_26 = arith.constant 0 : index
      %45 = vector.load %arg5[%c0_25, %c0_26] : memref<4x1xf32, #tpu.memory_space<vmem>>, vector<4x1xf32>
      tpu.vector_store %arg5[%c0_25, %c0_26], %44 {strides = array<i32>} : memref<4x1xf32, #tpu.memory_space<vmem>>, vector<4x1xf32>,
      %cst_27 = arith.constant 0.000000e+00 : f32
      %46 = vector.broadcast %cst_27 : f32 to vector<4x1xf32>
      %c0_28 = arith.constant 0 : index
      %c0_29 = arith.constant 0 : index
      %47 = vector.load %arg6[%c0_28, %c0_29] : memref<4x1xf32, #tpu.memory_space<vmem>>, vector<4x1xf32>
      tpu.vector_store %arg6[%c0_28, %c0_29], %46 {strides = array<i32>} : memref<4x1xf32, #tpu.memory_space<vmem>>, vector<4x1xf32>,
      %cst_30 = arith.constant 0.000000e+00 : f32
      %48 = vector.broadcast %cst_30 : f32 to vector<4x1xf32>
      %c0_31 = arith.constant 0 : index
      %c0_32 = arith.constant 0 : index
      %49 = vector.load %arg7[%c0_31, %c0_32] : memref<4x1xf32, #tpu.memory_space<vmem>>, vector<4x1xf32>
      tpu.vector_store %arg7[%c0_31, %c0_32], %48 {strides = array<i32>} : memref<4x1xf32, #tpu.memory_space<vmem>>, vector<4x1xf32>,
    } else {
    }
    %c0 = arith.constant 0 : index
    %c0_1 = arith.constant 0 : index
    %c0_2 = arith.constant 0 : index
    %3 = vector.load %arg2[%c0, %c0_1, %c0_2] : memref<1x4x256xf32, #tpu.memory_space<vmem>>, vector<1x4x256xf32>
    %4 = vector.shape_cast %3 : vector<1x4x256xf32> to vector<4x256xf32>
    %c0_3 = arith.constant 0 : index
    %c0_4 = arith.constant 0 : index
    %c0_5 = arith.constant 0 : index
    %5 = vector.load %arg3[%c0_3, %c0_4, %c0_5] : memref<1x1x256xi8, #tpu.memory_space<vmem>>, vector<1x1x256xi8>
    %6 = vector.shape_cast %5 : vector<1x1x256xi8> to vector<1x256xi8>
    %7 = arith.extsi %6 : vector<1x256xi8> to vector<1x256xi32>
    %8 = tpu.iota {dimensions = array<i32: 0>} : vector<4x256xi32>
    %cst = arith.constant dense<0xFF800000> : vector<256xf32>
    %9 = vector.multi_reduction <maximumf>, %4, %cst [0] : vector<4x256xf32> to vector<256xf32>
    %10 = vector.shape_cast %9 : vector<256xf32> to vector<1x256xf32>
    %11 = vector.broadcast %10 : vector<1x256xf32> to vector<4x256xf32>
    %12 = arith.cmpf oeq, %4, %11 : vector<4x256xf32>
    %c4_i32 = arith.constant 4 : i32
    %13 = vector.broadcast %c4_i32 : i32 to vector<4x256xi32>
    %14 = arith.select %12, %8, %13 : vector<4x256xi1>, vector<4x256xi32>
    %cst_6 = arith.constant dense<2147483647> : vector<256xi32>
    %15 = vector.multi_reduction <minsi>, %14, %cst_6 [0] : vector<4x256xi32> to vector<256xi32>
    %16 = vector.shape_cast %15 : vector<256xi32> to vector<1x256xi32>
    %17 = vector.broadcast %16 : vector<1x256xi32> to vector<4x256xi32>
    %18 = arith.cmpi eq, %8, %17 : vector<4x256xi32>
    %19 = arith.extui %18 : vector<4x256xi1> to vector<4x256xi32>
    %20 = arith.sitofp %19 : vector<4x256xi32> to vector<4x256xf32>
    %21 = vector.broadcast %7 : vector<1x256xi32> to vector<4x256xi32>
    %22 = arith.cmpi eq, %8, %21 : vector<4x256xi32>
    %23 = arith.extui %22 : vector<4x256xi1> to vector<4x256xi32>
    %24 = arith.sitofp %23 : vector<4x256xi32> to vector<4x256xf32>
    %c0_7 = arith.constant 0 : index
    %c0_8 = arith.constant 0 : index
    %25 = vector.load %arg5[%c0_7, %c0_8] : memref<4x1xf32, #tpu.memory_space<vmem>>, vector<4x1xf32>
    %26 = arith.mulf %20, %24 : vector<4x256xf32>
    %cst_9 = arith.constant dense<0.000000e+00> : vector<4xf32>
    %27 = vector.multi_reduction <add>, %26, %cst_9 [1] : vector<4x256xf32> to vector<4xf32>
    %28 = vector.shape_cast %27 : vector<4xf32> to vector<4x1xf32>
    %29 = arith.addf %25, %28 : vector<4x1xf32>
    %c0_10 = arith.constant 0 : index
    %c0_11 = arith.constant 0 : index
    %30 = vector.load %arg5[%c0_10, %c0_11] : memref<4x1xf32, #tpu.memory_space<vmem>>, vector<4x1xf32>
    tpu.vector_store %arg5[%c0_10, %c0_11], %29 {strides = array<i32>} : memref<4x1xf32, #tpu.memory_space<vmem>>, vector<4x1xf32>,
    %c0_12 = arith.constant 0 : index
    %c0_13 = arith.constant 0 : index
    %31 = vector.load %arg6[%c0_12, %c0_13] : memref<4x1xf32, #tpu.memory_space<vmem>>, vector<4x1xf32>
    %cst_14 = arith.constant dense<0.000000e+00> : vector<4xf32>
    %32 = vector.multi_reduction <add>, %20, %cst_14 [1] : vector<4x256xf32> to vector<4xf32>
    %33 = vector.shape_cast %32 : vector<4xf32> to vector<4x1xf32>
    %34 = arith.addf %31, %33 : vector<4x1xf32>
    %c0_15 = arith.constant 0 : index
    %c0_16 = arith.constant 0 : index
    %35 = vector.load %arg6[%c0_15, %c0_16] : memref<4x1xf32, #tpu.memory_space<vmem>>, vector<4x1xf32>
    tpu.vector_store %arg6[%c0_15, %c0_16], %34 {strides = array<i32>} : memref<4x1xf32, #tpu.memory_space<vmem>>, vector<4x1xf32>,
    %c0_17 = arith.constant 0 : index
    %c0_18 = arith.constant 0 : index
    %36 = vector.load %arg7[%c0_17, %c0_18] : memref<4x1xf32, #tpu.memory_space<vmem>>, vector<4x1xf32>
    %cst_19 = arith.constant dense<0.000000e+00> : vector<4xf32>
    %37 = vector.multi_reduction <add>, %24, %cst_19 [1] : vector<4x256xf32> to vector<4xf32>
    %38 = vector.shape_cast %37 : vector<4xf32> to vector<4x1xf32>
    %39 = arith.addf %36, %38 : vector<4x1xf32>
    %c0_20 = arith.constant 0 : index
    %c0_21 = arith.constant 0 : index
    %40 = vector.load %arg7[%c0_20, %c0_21] : memref<4x1xf32, #tpu.memory_space<vmem>>, vector<4x1xf32>
    tpu.vector_store %arg7[%c0_20, %c0_21], %39 {strides = array<i32>} : memref<4x1xf32, #tpu.memory_space<vmem>>, vector<4x1xf32>,
    %c0_i32_22 = arith.constant 0 : i32
    %41 = arith.cmpi eq, %arg1, %c0_i32_22 : i32
    %42 = arith.extui %41 : i1 to i32
    %c0_i32_23 = arith.constant 0 : i32
    %43 = arith.cmpi ne, %42, %c0_i32_23 : i32
    scf.if %43 {
      %c0_24 = arith.constant 0 : index
      %c0_25 = arith.constant 0 : index
      %44 = vector.load %arg6[%c0_24, %c0_25] : memref<4x1xf32, #tpu.memory_space<vmem>>, vector<4x1xf32>
      %c0_26 = arith.constant 0 : index
      %c0_27 = arith.constant 0 : index
      %45 = vector.load %arg7[%c0_26, %c0_27] : memref<4x1xf32, #tpu.memory_space<vmem>>, vector<4x1xf32>
      %46 = arith.addf %44, %45 : vector<4x1xf32>
      %cst_28 = arith.constant 1.000000e+00 : f32
      %47 = vector.broadcast %cst_28 : f32 to vector<4x1xf32>
      %48 = arith.maximumf %46, %47 : vector<4x1xf32>
      %c0_29 = arith.constant 0 : index
      %c0_30 = arith.constant 0 : index
      %49 = vector.load %arg5[%c0_29, %c0_30] : memref<4x1xf32, #tpu.memory_space<vmem>>, vector<4x1xf32>
      %cst_31 = arith.constant 2.000000e+00 : f32
      %50 = vector.broadcast %cst_31 : f32 to vector<4x1xf32>
      %51 = arith.mulf %50, %49 : vector<4x1xf32>
      %52 = arith.divf %51, %48 : vector<4x1xf32>
      %c0_32 = arith.constant 0 : index
      %c0_33 = arith.constant 0 : index
      %c0_34 = arith.constant 0 : index
      %53 = vector.load %arg4[%c0_32, %c0_33, %c0_34] : memref<1x4x1xf32, #tpu.memory_space<vmem>>, vector<1x4x1xf32>
      %54 = vector.shape_cast %53 : vector<1x4x1xf32> to vector<4x1xf32>
      %55 = vector.shape_cast %52 : vector<4x1xf32> to vector<1x4x1xf32>
      tpu.vector_store %arg4[%c0_32, %c0_33, %c0_34], %55 {strides = array<i32>} : memref<1x4x1xf32, #tpu.memory_space<vmem>>, vector<1x4x1xf32>,
    } else {
    }
    return
  }
  func.func @transform_0(%arg0: i32, %arg1: i32) -> (i32, i32, i32) {
    %c0_i32 = arith.constant 0 : i32
    %c0_i32_0 = arith.constant 0 : i32
    return %arg0, %c0_i32, %arg1 : i32, i32, i32
  }
  func.func @transform_1(%arg0: i32, %arg1: i32) -> (i32, i32, i32) {
    %c0_i32 = arith.constant 0 : i32
    %c0_i32_0 = arith.constant 0 : i32
    return %arg0, %c0_i32, %arg1 : i32, i32, i32
  }
  func.func @transform_2(%arg0: i32, %arg1: i32) -> (i32, i32, i32) {
    %c0_i32 = arith.constant 0 : i32
    %c0_i32_0 = arith.constant 0 : i32
    %c0_i32_1 = arith.constant 0 : i32
    return %arg0, %c0_i32, %c0_i32_0 : i32, i32, i32
  }
}

</mosaic_0001>

<llo_original>
// kernel: tpu_custom_call.1
$region0: #{tpu_custom_call.1}
  #allocation0 [shape = 'u32[]', space=smem, size = 0x4, offset = 0x4, fixed_abs, tag = 'smem constant byte address 0x4 - core index']
  #allocation1 [shape = 'u32[144,128]{1,0:T(1,128)}', space=vmem, size = 0x12000, scoped, tag = 'internal scratch']
  #allocation2 [shape = 'f32[4,1]{1,0:T(4,128)}', space=vmem, size = 0x800, scoped, tag = 'scratch operand']
  #allocation3 [shape = 'f32[4,1]{1,0:T(4,128)}', space=vmem, size = 0x800, scoped, tag = 'scratch operand']
  #allocation4 [shape = 'f32[4,1]{1,0:T(4,128)}', space=vmem, size = 0x800, scoped, tag = 'scratch operand']
  %s0 = inlined_call_operand.hbm [shape: f32[2,4,256], index: 0, kind: input, shape index: {}]
  %s1 = inlined_call_operand.vmem [shape: s8[2,1,256], index: 1, kind: input, shape index: {}]
  %s2 = inlined_call_operand.vmem [shape: f32[2,4,1], index: 2, kind: output, shape index: {}]
  %s3 = sld [smem:[#allocation0]]
  $region53: #{tpu_custom_call.1} parent=0
    _
  %s5 = ssub.s32 1, %s3
  %s6 = scalar_select 0, %s5, %s3
  $region1: #{tpu_custom_call.1} parent=0
    #allocation5 [shape = 'u8[8192]{0}', space=vmem, size = 0x2000, scoped, tag = 'input window, operand 0']
    #allocation6 [shape = 's32[2]{0}', space=sflag, size = 0x8, scoped, tag = 'scoped memory for tpu_custom_call.1']
    %7 = vsyncpa [#allocation6], 0
    %s8 = scalar_lea.sflag [#allocation6], 1
    %9 = vsyncpa %s8, 0
    loop: start=0, step=1, limit=4
    $region2: #{tpu_custom_call.1} parent=1 // loop_pre_header
      _
    $region3: #{tpu_custom_call.1} parent=1 // loop_header
      %s11 = sphi 0, %s15
      %p12 = scmp.ge.s32.totalorder %s11, 4
      %s18 = sphi 0, %s30
      %s19 = sphi 0, %s26
      %s20 = sphi 0, %s18
      %s21 = sphi 0, %s19
      %s22 = sphi 0, %s20
      %s23 = sphi 0, %s21
      %s35 = sphi 0, %s37
      %s38 = sphi 0, %s35
      %s39 = sphi 0, %s38
      %s55 = sphi 0, %s39
      %s63 = sphi 0, %s65
      %s66 = sphi 0, %s63
      %s67 = sphi 0, %s66
      %s83 = sphi 0, %s67
      %s89 = sphi 0, %s91
      %s92 = sphi 0, %s89
      %s93 = sphi 0, %s92
      %s109 = sphi 0, %s93
    $region4: #{tpu_custom_call.1} parent=1 // loop_header_branch
      %14 = sbr.rel (%p12) target = $region8
    $region5: #{tpu_custom_call.1} parent=1 // loop_body
      %s16 = ssub.s32 %s11, 1
      %s17 = ssub.s32 %s11, 2
      %s24 = sadd.s32 1, %s19
      %p25 = scmp.ge.s32.totalorder %s24, 1
      %s26 = scalar_select %p25, 0, %s24
      %s27 = sadd.s32 1, %s18
      %s28 = scalar_select %p25, %s27, %s18
      %p29 = scmp.ge.s32.totalorder %s28, 2
      %s30 = scalar_select %p29, 0, %s28
      %s31 = ssub.s32 %s18, %s30
      %s32 = ssub.s32 %s19, %s26
      %s33 = sor.u32 %s31, %s32
      %p34 = scmp.eq.s32.totalorder %s33, 0
      %s36 = sadd.s32 %s35, 1
      %s37 = scalar_select %p34, %s35, %s36
      %p40 = pneg %p34
      %p41 = scmp.eq.s32.totalorder %s11, 1
      %p42 = por %p40, %p41
      %p43 = scmp.ne.s32.totalorder %s35, %s38
      %p44 = scmp.eq.s32.totalorder %s11, 0
      %p45 = por %p43, %p44
      %p46 = scmp.ne.s32.totalorder %s35, %s38
      %p47 = scmp.eq.s32.totalorder %s16, 1
      %p48 = por %p46, %p47
      %p49 = scmp.ne.s32.totalorder %s38, %s39
      %p50 = scmp.eq.s32.totalorder %s16, 0
      %p51 = por %p49, %p50
      %p52 = scmp.ne.s32.totalorder %s38, %s39
      %p53 = scmp.eq.s32.totalorder %s17, 1
      %p54 = por %p52, %p53
      %p56 = scmp.ne.s32.totalorder %s39, %s55
      %p57 = scmp.eq.s32.totalorder %s17, 0
      %p58 = por %p56, %p57
      %s59 = ssub.s32 %s18, %s30
      %s60 = ssub.s32 %s19, %s26
      %s61 = sor.u32 %s59, %s60
      %p62 = scmp.eq.s32.totalorder %s61, 0
      %s64 = sadd.s32 %s63, 1
      %s65 = scalar_select %p62, %s63, %s64
      %p68 = pneg %p62
      %p69 = scmp.eq.s32.totalorder %s11, 1
      %p70 = por %p68, %p69
      %p71 = scmp.ne.s32.totalorder %s63, %s66
      %p72 = scmp.eq.s32.totalorder %s11, 0
      %p73 = por %p71, %p72
      %p74 = scmp.ne.s32.totalorder %s63, %s66
      %p75 = scmp.eq.s32.totalorder %s16, 1
      %p76 = por %p74, %p75
      %p77 = scmp.ne.s32.totalorder %s66, %s67
      %p78 = scmp.eq.s32.totalorder %s16, 0
      %p79 = por %p77, %p78
      %p80 = scmp.ne.s32.totalorder %s66, %s67
      %p81 = scmp.eq.s32.totalorder %s17, 1
      %p82 = por %p80, %p81
      %p84 = scmp.ne.s32.totalorder %s67, %s83
      %p85 = scmp.eq.s32.totalorder %s17, 0
      %p86 = por %p84, %p85
      %s87 = ssub.s32 %s18, %s30
      %p88 = scmp.eq.s32.totalorder %s87, 0
      %s90 = sadd.s32 %s89, 1
      %s91 = scalar_select %p88, %s89, %s90
      %p94 = pneg %p88
      %p95 = scmp.eq.s32.totalorder %s11, 1
      %p96 = por %p94, %p95
      %p97 = scmp.ne.s32.totalorder %s89, %s92
      %p98 = scmp.eq.s32.totalorder %s11, 0
      %p99 = por %p97, %p98
      %p100 = scmp.ne.s32.totalorder %s89, %s92
      %p101 = scmp.eq.s32.totalorder %s16, 1
      %p102 = por %p100, %p101
      %p103 = scmp.ne.s32.totalorder %s92, %s93
      %p104 = scmp.eq.s32.totalorder %s16, 0
      %p105 = por %p103, %p104
      %p106 = scmp.ne.s32.totalorder %s92, %s93
      %p107 = scmp.eq.s32.totalorder %s17, 1
      %p108 = por %p106, %p107
      %p110 = scmp.ne.s32.totalorder %s93, %s109
      %p111 = scmp.eq.s32.totalorder %s17, 0
      %p112 = por %p110, %p111
      %p113 = scmp.le.s32.totalorder 1, %s11
      %p114 = scmp.lt.s32.totalorder %s11, 3
      %p115 = pnand %p113, %p114
      %p116 = pneg %p115
      // Predicated region
      $region9: #{tpu_custom_call.1} parent=5 // pred_check
        _
      $region10: #{tpu_custom_call.1} parent=5 // pred_check_branch
        %118 = sbr.rel (%p115) target = $region12
      $region11: #{tpu_custom_call.1} parent=5 // pred_region
        %s119 = ssub.s32 %s11, 1
      $region12: #{tpu_custom_call.1} parent=5 // pred_fallthru
        _
      %p120 = scmp.lt.s32.totalorder %s11, 2
      // Predicated region
      $region13: #{tpu_custom_call.1} parent=5 // pred_check
        %p121 = pneg %p120
      $region14: #{tpu_custom_call.1} parent=5 // pred_check_branch
        %123 = sbr.rel (%p121) target = $region16
      $region15: #{tpu_custom_call.1} parent=5 // pred_region
        // Predicated region
        $region17: #{tpu_custom_call.1} parent=15 // pred_check
          %p124 = pneg %p45
        $region18: #{tpu_custom_call.1} parent=15 // pred_check_branch
          %126 = sbr.rel (%p124) target = $region20
        $region19: #{tpu_custom_call.1} parent=15 // pred_region
          %s127 = sand.u32 %s35, 1
          %s128 = scalar_lea.sflag [#allocation6], %s127
          %s129 = sand.u32 %s35, 1
          %s130 = smul.addr %s129, 8
          %s131 = scalar_lea.vmem [#allocation5], %s130
          %s132 = smul.u32 2, %s19
          %s134 = ssub.s32 128, 128
          %135 = vsyncadd %s128, %s134
          %s136 = smul.addr %s18, 2
          %s137 = sadd.s32 %s132, %s136
          %s138 = smul.addr %s137, 64
          %s139 = scalar_lea.hbm %s0, %s138
          %s141 = sshll.u32 %s131, 4
          %s142 = int_to_ptr.vmem [resolvable:$true] %s141
          %144 = dma.hbm_to_vmem [thread:$0]  %s139, 128, %s142, %s128
        $region20: #{tpu_custom_call.1} parent=15 // pred_fallthru
          _
        // Predicated region
        $region21: #{tpu_custom_call.1} parent=15 // pred_check
          %p145 = pneg %p73
        $region22: #{tpu_custom_call.1} parent=15 // pred_check_branch
          %147 = sbr.rel (%p145) target = $region24
        $region23: #{tpu_custom_call.1} parent=15 // pred_region
          %s148 = smul.u32 2, %s19
          %p149 = scmp.lt.s32.totalorder %s18, 1
          %s150 = scalar_select %p149, %s18, 1
          %p151 = scmp.lt.s32.totalorder %s148, 1
          %s152 = scalar_select %p151, %s148, 1
          %s153 = smul.addr %s150, 2
          %s154 = sadd.s32 %s152, %s153
          %s155 = scalar_lea.vmem %s1, %s154
          %s156 = smul.u32 2, %s19
        $region24: #{tpu_custom_call.1} parent=15 // pred_fallthru
          _
      $region16: #{tpu_custom_call.1} parent=5 // pred_fallthru
        _
      %p157 = scmp.le.s32.totalorder 1, %s11
      %p158 = scmp.lt.s32.totalorder %s11, 3
      %p159 = pnand %p157, %p158
      %p160 = pneg %p159
      // Predicated region
      $region25: #{tpu_custom_call.1} parent=5 // pred_check
        _
      $region26: #{tpu_custom_call.1} parent=5 // pred_check_branch
        %162 = sbr.rel (%p159) target = $region28
      $region27: #{tpu_custom_call.1} parent=5 // pred_region
        %s163 = ssub.s32 %s11, 1
        %s164 = sand.u32 %s38, 1
        %s165 = scalar_lea.sflag [#allocation6], %s164
        %s166 = sand.u32 %s38, 1
        %s167 = smul.addr %s166, 8
        %s168 = scalar_lea.vmem [#allocation5], %s167
        // Predicated region
        $region29: #{tpu_custom_call.1} parent=27 // pred_check
          %p169 = pneg %p51
        $region30: #{tpu_custom_call.1} parent=27 // pred_check_branch
          %171 = sbr.rel (%p169) target = $region32
        $region31: #{tpu_custom_call.1} parent=27 // pred_region
          %172 = dma.done %s165, 128
        $region32: #{tpu_custom_call.1} parent=27 // pred_fallthru
          _
        %s173 = sand.u32 %s38, 1
        %s174 = scalar_lea.sflag [#allocation6], %s173
        %s175 = sand.u32 %s38, 1
        %s176 = smul.addr %s175, 8
        %s177 = scalar_lea.vmem [#allocation5], %s176
        %p178 = pneg %p51
        %p179 = pneg %p48
        %s180 = smul.u32 2, %s21
        %p181 = scmp.lt.s32.totalorder %s20, 1
        %s182 = scalar_select %p181, %s20, 1
        %p183 = scmp.lt.s32.totalorder %s180, 1
        %s184 = scalar_select %p183, %s180, 1
        %s185 = smul.addr %s182, 2
        %s186 = sadd.s32 %s184, %s185
        %s187 = scalar_lea.vmem %s1, %s186
        %p188 = pneg %p79
        %p189 = pneg %p76
        %p190 = pneg %p105
        %p191 = pneg %p102
        %p192 = scmp.lt.s32.totalorder %s20, 1
        %s193 = scalar_select %p192, %s20, 1
        %s194 = smul.addr %s193, 4
        %s195 = scalar_lea.vmem %s2, %s194
        %s196 = smul.u32 2, %s21
        %s197 = smul.u32 2, %s21
        %p198 = scmp.lt.s32.totalorder %s20, 1
        %s199 = scalar_select %p198, %s20, 1
        %p200 = scmp.lt.s32.totalorder %s197, 1
        %s201 = scalar_select %p200, %s197, 1
        %s202 = smul.addr %s199, 2
        %s203 = sadd.s32 %s201, %s202
        %s204 = scalar_lea.vmem %s1, %s203
        %s205 = smul.u32 2, %s21
        %p206 = scmp.lt.s32.totalorder %s20, 1
        %s207 = scalar_select %p206, %s20, 1
        %s208 = smul.addr %s207, 4
        %s209 = scalar_lea.vmem %s2, %s208
        %p210 = scmp.eq.s32.totalorder %s21, 0
        // Predicated region
        $region33: #{tpu_custom_call.1} parent=27 // pred_check
          %p211 = pneg %p210
        $region34: #{tpu_custom_call.1} parent=27 // pred_check_branch
          %213 = sbr.rel (%p211) target = $region36
        $region35: #{tpu_custom_call.1} parent=27 // pred_region
          %vm214 = vcmask 3072
          %215 = vst.msk [vmem:[#allocation2] sm:$0xf] %vm214, 0.0
          %216 = vst.msk [vmem:[#allocation3] sm:$0xf] %vm214, 0.0
          %217 = vst.msk [vmem:[#allocation4] sm:$0xf] %vm214, 0.0
        $region36: #{tpu_custom_call.1} parent=27 // pred_fallthru
          _
        %v218 = vld [vmem:[%s168] sm:$0xff]
        %v219 = vld [vmem:[%s204] sm:$0x3]
        %v220 = vunpack.c.0.s8 %v219
        %v221 = vlaneseq
        %v222 = vshrl.u32 %v221, 7
        %v224 = vcombine.high %v218, %v218
        %vm226 = vcmask 1043456
        %v227 = vsel %vm226, %v218, -inf
        %v228 = vrot.slane %v227, 4
        %v229 = vmax.f32 %v227, %v228
        %v230 = vrot.slane %v229, 2
        %v231 = vmax.f32 %v229, %v230
        %v232 = vrot.slane %v231, 1
        %v233 = vmax.f32 %v231, %v232
        %v234 = vsel %vm226, %v224, -inf
        %v235 = vrot.slane %v234, 4
        %v236 = vmax.f32 %v234, %v235
        %v237 = vrot.slane %v236, 2
        %v238 = vmax.f32 %v236, %v237
        %v239 = vrot.slane %v238, 1
        %v240 = vmax.f32 %v238, %v239
        %v243 = vcombine.low %v233, %v240
        %vm245 = vcmp.eq.f32.partialorder %v218, %v243
        %v247 = vunpack.c.l.s4 839922192
        %v248 = vunpack.c.0.s8 %v247
        %v249 = vlaneseq
        %v250 = vshrl.u32 %v249, 7
        %v251 = vsub.s32 %v248, %v250
        %v252 = vrot.slane %v222, %v251
        %v253 = vsel %vm245, %v252, 4
        %v254 = vcombine.high %v253, %v253
        %v255 = vsel %vm226, %v253, 2147483647
        %v256 = vrot.slane %v255, 4
        %vm257 = vcmp.lt.s32.totalorder %v255, %v256
        %v258 = vsel %vm257, %v255, %v256
        %v259 = vrot.slane %v258, 2
        %vm260 = vcmp.lt.s32.totalorder %v258, %v259
        %v261 = vsel %vm260, %v258, %v259
        %v262 = vrot.slane %v261, 1
        %vm263 = vcmp.lt.s32.totalorder %v261, %v262
        %v264 = vsel %vm263, %v261, %v262
        %v265 = vsel %vm226, %v254, 2147483647
        %v266 = vrot.slane %v265, 4
        %vm267 = vcmp.lt.s32.totalorder %v265, %v266
        %v268 = vsel %vm267, %v265, %v266
        %v269 = vrot.slane %v268, 2
        %vm270 = vcmp.lt.s32.totalorder %v268, %v269
        %v271 = vsel %vm270, %v268, %v269
        %v272 = vrot.slane %v271, 1
        %vm273 = vcmp.lt.s32.totalorder %v271, %v272
        %v274 = vsel %vm273, %v271, %v272
        %vm275 = vcmp.eq.s32.totalorder %v222, %v264
        %vm276 = vcmp.eq.s32.totalorder %v222, %v274
        %v277 = vsel %vm275, 1, 0
        %v278 = vsel %vm276, 1, 0
        %v279 = vcvt.s32.f32 %v277
        %v280 = vcvt.s32.f32 %v278
        %v281 = vlaneseq
        %v282 = vshrl.u32 %v281, 7
        %v283 = vsub.s32 0, %v282
        %v284 = vrot.slane %v220, %v283
        %v285 = vlaneseq
        %v286 = vshrl.u32 %v285, 7
        %v287 = vsub.s32 4, %v286
        %v288 = vrot.slane %v220, %v287
        %v289 = vlaneseq
        %v290 = vshrl.u32 %v289, 7
        %v291 = vsub.s32 0, %v290
        %v292 = vrot.slane %v284, %v291
        %v293 = vlaneseq
        %v294 = vshrl.u32 %v293, 7
        %v295 = vsub.s32 0, %v294
        %v296 = vrot.slane %v288, %v295
        %vm297 = vcmp.eq.s32.totalorder %v222, %v292
        %vm298 = vcmp.eq.s32.totalorder %v222, %v296
        %v299 = vsel %vm297, 1, 0
        %v300 = vsel %vm298, 1, 0
        %v301 = vcvt.s32.f32 %v299
        %v302 = vcvt.s32.f32 %v300
        %v303 = vld [vmem:[#allocation2] sm:$0xf]
        %v304 = vmul.f32 %v279, %v301
        %v305 = vmul.f32 %v280, %v302
        %v306 = vsel %vm226, %v304, 0.0
        %v307 = vsel %vm226, %v305, 0.0
        %v308 = vadd.f32 %v306, %v307
        %309 = vadd.xlane.f32.xlu0 %v308
        %v310 = vpop.xlane.xlu0 %309
        %v311 = vadd.f32 %v303, %v310
        %vm312 = vcmask 3072
        %313 = vst.msk [vmem:[#allocation2] sm:$0xf] %vm312, %v311
        %v314 = vld [vmem:[#allocation3] sm:$0xf]
        %v315 = vsel %vm226, %v279, 0.0
        %v316 = vsel %vm226, %v280, 0.0
        %v317 = vadd.f32 %v315, %v316
        %318 = vadd.xlane.f32.xlu0 %v317
        %v319 = vpop.xlane.xlu0 %318
        %v320 = vadd.f32 %v314, %v319
        %321 = vst.msk [vmem:[#allocation3] sm:$0xf] %vm312, %v320
        %v322 = vld [vmem:[#allocation4] sm:$0xf]
        %v323 = vsel %vm226, %v301, 0.0
        %v324 = vsel %vm226, %v302, 0.0
        %v325 = vadd.f32 %v323, %v324
        %326 = vadd.xlane.f32.xlu0 %v325
        %v327 = vpop.xlane.xlu0 %326
        %v328 = vadd.f32 %v322, %v327
        %329 = vst.msk [vmem:[#allocation4] sm:$0xf] %vm312, %v328
        // Predicated region
        $region37: #{tpu_custom_call.1} parent=27 // pred_check
          %p330 = pneg %p210
        $region38: #{tpu_custom_call.1} parent=27 // pred_check_branch
          %332 = sbr.rel (%p330) target = $region40
        $region39: #{tpu_custom_call.1} parent=27 // pred_region
          %v333 = vld [vmem:[#allocation3] sm:$0xf]
          %v334 = vld [vmem:[#allocation4] sm:$0xf]
          %v335 = vadd.f32 %v333, %v334
          %v336 = vmax.f32 %v335, 1.0
          %v337 = vld [vmem:[#allocation2] sm:$0xf]
          %v338 = vmul.f32 %v337, 2.0
          %v339 = vrcp.pop %v336
          %v340 = vmul.f32 %v338, %v339
          %341 = vst.msk [vmem:[%s209] sm:$0xf] %vm312, %v340
        $region40: #{tpu_custom_call.1} parent=27 // pred_fallthru
          _
        %p342 = scmp.lt.s32.totalorder %s20, 1
        %s343 = scalar_select %p342, %s20, 1
        %s344 = smul.addr %s343, 4
        %s345 = scalar_lea.vmem %s2, %s344
        // Predicated region
        $region41: #{tpu_custom_call.1} parent=27 // pred_check
          %p346 = pneg %p102
        $region42: #{tpu_custom_call.1} parent=27 // pred_check_branch
          %348 = sbr.rel (%p346) target = $region44
        $region43: #{tpu_custom_call.1} parent=27 // pred_region
          _
        $region44: #{tpu_custom_call.1} parent=27 // pred_fallthru
          _
      $region28: #{tpu_custom_call.1} parent=5 // pred_fallthru
        _
      %p349 = scmp.le.s32.totalorder 2, %s11
      // Predicated region
      $region45: #{tpu_custom_call.1} parent=5 // pred_check
        %p350 = pneg %p349
      $region46: #{tpu_custom_call.1} parent=5 // pred_check_branch
        %352 = sbr.rel (%p350) target = $region48
      $region47: #{tpu_custom_call.1} parent=5 // pred_region
        %s353 = ssub.s32 %s11, 2
        // Predicated region
        $region49: #{tpu_custom_call.1} parent=47 // pred_check
          %p354 = pneg %p108
        $region50: #{tpu_custom_call.1} parent=47 // pred_check_branch
          %356 = sbr.rel (%p354) target = $region52
        $region51: #{tpu_custom_call.1} parent=47 // pred_region
          %p357 = scmp.lt.s32.totalorder %s22, 1
          %s358 = scalar_select %p357, %s22, 1
          %s359 = smul.addr %s358, 4
          %s360 = scalar_lea.vmem %s2, %s359
        $region52: #{tpu_custom_call.1} parent=47 // pred_fallthru
          _
      $region48: #{tpu_custom_call.1} parent=5 // pred_fallthru
        _
    $region6: #{tpu_custom_call.1} parent=1 // loop_footer
      %s15 = sadd.s32 1, %s11
    $region7: #{tpu_custom_call.1} parent=1 // loop_footer_branch
      %10 = sbr.rel target = $region3
    $region8: #{tpu_custom_call.1} parent=1 // loop_exit
      _
    %361 = vsyncpa [#allocation6], 1
    %s362 = scalar_lea.sflag [#allocation6], 1
    %363 = vsyncpa %s362, 1

</llo_original>
